<compile_context>
chip_gen: v7x
topology: tpu7x:2x2x1
jax: 0.10.0
libtpu: 0.0.40
codegen_flags: <defaults>
</compile_context>

<pallas_src>
import functools
import math

import jax
import jax.numpy as jnp
from jax.experimental import pallas as pl
from jax.experimental.pallas import tpu as pltpu

_LANES = 128
_SUBLANE_GRANULE = 16        # keeps f32 (8,128) and bf16 (16,128) tiles unmasked
_MIN_TARGET_GRID_STEPS = 4   # pipeline depth + lets v7x split the parallel axis over 2 TCs
_DEFAULT_TILE_ROWS = 2048    # ~16.5 MiB double-buffered at f32 -> fits every generation
_MIN_PALLAS_RAYS_SOA = 32_768    # below this the fused jnp path wins (launch overhead)
_MIN_PALLAS_RAYS_AOS = 262_144   # AoS must also amortize the wrapper transpose pass


def _round_up(x, m):
    return ((x + m - 1) // m) * m


# --------------------------------------------------------------------------- #
# Kernel
# --------------------------------------------------------------------------- #
def _sphere_collider_kernel(o_ref, d_ref, nears_ref, fars_ref, mask_ref,
                            *, rr, near_plane, far_plane):
    # o_ref / d_ref: (3, tile_r, 128) SoA blocks.  Indexing the leading axis
    # gives fully lane- and sublane-dense (tile_r, 128) component planes:
    # pure VPU elementwise math, the sqrt rides the EUP slot, no XLU work.
    ox = o_ref[0].astype(jnp.float32)
    oy = o_ref[1].astype(jnp.float32)
    oz = o_ref[2].astype(jnp.float32)
    dx = d_ref[0].astype(jnp.float32)
    dy = d_ref[1].astype(jnp.float32)
    dz = d_ref[2].astype(jnp.float32)

    # ray_cam_dot = sum(directions * origins, -1)
    ray_cam_dot = ox * dx + oy * dy + oz * dz
    # dd = ||origins||^2 - ray_cam_dot^2
    dd = (ox * ox + oy * oy + oz * oz) - ray_cam_dot * ray_cam_dot

    no_intersect = (ray_cam_dot >= 0.0) | (dd >= rr)

    # torch sqrt's a possibly-negative (rr - dd) -> NaN, then masks it with
    # torch.where; clamping before sqrt yields identical final outputs.
    half_len = jnp.sqrt(jnp.maximum(rr - dd, 0.0))

    nears_ref[...] = jnp.where(no_intersect, near_plane,
                               -half_len - ray_cam_dot).astype(nears_ref.dtype)
    fars_ref[...] = jnp.where(no_intersect, far_plane,
                              half_len - ray_cam_dot).astype(fars_ref.dtype)
    mask_ref[...] = no_intersect.astype(mask_ref.dtype)


# --------------------------------------------------------------------------- #
# Reference / small-batch path
# --------------------------------------------------------------------------- #
def _sphere_collider_jnp(origins, directions, *, rr, near_plane, far_plane, axis=-1):
    """Plain-jnp path (small batches and the correctness reference)."""
    o = origins.astype(jnp.float32)
    d = directions.astype(jnp.float32)
    rcd = jnp.sum(d * o, axis=axis, keepdims=True)
    dd = jnp.sum(o * o, axis=axis, keepdims=True) - rcd * rcd
    no_int = (rcd >= 0.0) | (dd >= rr)
    half = jnp.sqrt(jnp.maximum(rr - dd, 0.0))
    nears = jnp.where(no_int, near_plane, -half - rcd).astype(origins.dtype)
    fars = jnp.where(no_int, far_plane, half - rcd).astype(origins.dtype)
    return nears, fars, no_int


# --------------------------------------------------------------------------- #
# Tiling / VMEM sizing
# --------------------------------------------------------------------------- #
def _vmem_bytes(tile_r, in_itemsize, out_itemsize):
    in_block = 3 * tile_r * _LANES * in_itemsize           # per input, per buffer
    out_block = tile_r * _LANES * (2 * out_itemsize + 1)   # nears + fars + int8 mask
    return 2 * (2 * in_block + out_block)                  # double-buffered in/out


def _choose_tile_rows(rows, tile_rows, in_itemsize, out_itemsize):
    # Aim for >= _MIN_TARGET_GRID_STEPS grid steps so the DMA pipeline has
    # depth and the "parallel" grid axis can be split across both v7x TCs.
    target = _round_up(pl.cdiv(rows, _MIN_TARGET_GRID_STEPS), _SUBLANE_GRANULE)
    tile_r = max(_SUBLANE_GRANULE, min(int(tile_rows), target))
    # Keep the block start/extent inside the array's row count (the last grid
    # block may still be a ragged edge block, which Pallas pads/masks).
    tile_r = min(tile_r, max(8, (rows // 8) * 8))
    # Cap the double-buffered footprint at ~60% of physical VMEM:
    # v7x (64 MiB) caps tile_r around ~4.5K rows; v5e/v6e (128 MiB) allow more.
    try:
        vmem_cap = int(pltpu.get_tpu_info().vmem_capacity_bytes)
    except Exception:  # conservative fallback (v7x-sized)
        vmem_cap = 64 << 20
    budget = int(0.6 * vmem_cap)
    while _vmem_bytes(tile_r, in_itemsize, out_itemsize) > budget and tile_r > 8:
        tile_r = max(8, ((tile_r // 2) // 8) * 8)
    return tile_r, vmem_cap


# --------------------------------------------------------------------------- #
# Pallas runner (SoA (3, rows, 128) layout)
# --------------------------------------------------------------------------- #
def _run_pallas(o3, d3, *, rr, near_plane, far_plane, out_dtype, tile_rows):
    _, rows, _ = o3.shape
    in_isz = jnp.dtype(o3.dtype).itemsize
    out_isz = jnp.dtype(out_dtype).itemsize
    tile_r, vmem_cap = _choose_tile_rows(rows, tile_rows, in_isz, out_isz)
    grid = (pl.cdiv(rows, tile_r),)

    vmem_need = _vmem_bytes(tile_r, in_isz, out_isz)
    vmem_limit = int(min(max(vmem_need + (4 << 20), 32 << 20), int(0.9 * vmem_cap)))

    kernel = functools.partial(_sphere_collider_kernel, rr=rr,
                               near_plane=near_plane, far_plane=far_plane)

    nears, fars, mask = pl.pallas_call(
        kernel,
        grid=grid,
        in_specs=[
            pl.BlockSpec((3, tile_r, _LANES), lambda i: (0, i, 0)),
            pl.BlockSpec((3, tile_r, _LANES), lambda i: (0, i, 0)),
        ],
        out_specs=[
            pl.BlockSpec((tile_r, _LANES), lambda i: (i, 0)),
            pl.BlockSpec((tile_r, _LANES), lambda i: (i, 0)),
            pl.BlockSpec((tile_r, _LANES), lambda i: (i, 0)),
        ],
        out_shape=(
            jax.ShapeDtypeStruct((rows, _LANES), out_dtype),
            jax.ShapeDtypeStruct((rows, _LANES), out_dtype),
            jax.ShapeDtypeStruct((rows, _LANES), jnp.int8),
        ),
        compiler_params=pltpu.CompilerParams(
            dimension_semantics=("parallel",),
            vmem_limit_bytes=vmem_limit),
    )(o3, d3)
    return nears, fars, mask


# --------------------------------------------------------------------------- #
# Public API
# --------------------------------------------------------------------------- #
def sphere_collider_soa(origins_soa, directions_soa, *, radius=1.0, near_plane=0.1,
                        far_plane=1000.0, tile_rows=_DEFAULT_TILE_ROWS, use_pallas=None):
    """SphereCollider numerics on SoA rays: origins/directions of shape (3, N).

    Fast path: when N is a multiple of 128 (and >= 1024) there are NO wrapper
    copies on the input side; every kernel block is lane/sublane dense.
    Returns (nears, fars, no_intersect_mask), each (N, 1); nears/fars keep the
    input dtype, mask is bool (True = ray misses the sphere).
    """
    assert origins_soa.shape == directions_soa.shape
    assert origins_soa.ndim == 2 and origins_soa.shape[0] == 3
    n = origins_soa.shape[1]
    rr = float(radius) ** 2
    near_plane = float(near_plane)
    far_plane = float(far_plane)

    if use_pallas is None:
        use_pallas = n >= _MIN_PALLAS_RAYS_SOA
    if not use_pallas:
        nears, fars, mask = _sphere_collider_jnp(origins_soa, directions_soa, rr=rr,
                                                 near_plane=near_plane,
                                                 far_plane=far_plane, axis=0)
        return nears.reshape(n, 1), fars.reshape(n, 1), mask.reshape(n, 1)

    # Rare non-128-multiple batches pay one (fused) pad pass; 128-aligned
    # batches (the common case) take the zero-copy view below.
    n_pad = max(_round_up(n, _LANES), 8 * _LANES)
    o, d = origins_soa, directions_soa
    if n_pad != n:
        o = jnp.pad(o, ((0, 0), (0, n_pad - n)))
        d = jnp.pad(d, ((0, 0), (0, n_pad - n)))
    rows = n_pad // _LANES
    o3 = o.reshape(3, rows, _LANES)   # free, row-major contiguous view
    d3 = d.reshape(3, rows, _LANES)

    nears2, fars2, mask2 = _run_pallas(o3, d3, rr=rr, near_plane=near_plane,
                                       far_plane=far_plane,
                                       out_dtype=origins_soa.dtype,
                                       tile_rows=tile_rows)

    nears = nears2.reshape(n_pad)   # free reshapes of the lane-dense buffers
    fars = fars2.reshape(n_pad)
    mask = mask2.reshape(n_pad)
    if n_pad != n:
        nears, fars, mask = nears[:n], fars[:n], mask[:n]
    # int8 -> bool fuses with this single output pass under jit.
    return nears.reshape(n, 1), fars.reshape(n, 1), (mask != 0).reshape(n, 1)


def sphere_collider(origins, directions, *, radius=1.0, near_plane=0.1,
                    far_plane=1000.0, tile_rows=_DEFAULT_TILE_ROWS, use_pallas=None):
    """AoS convenience wrapper: origins/directions shaped [..., 3].

    NOTE: AoS inputs require one AoS->SoA transpose pass over the rays; for a
    memory-bound op prefer sphere_collider_soa() with producer-side (3, N)
    rays (e.g. cache the SoA layout on the RayBundle).
    Returns (nears, fars, no_intersect_mask), each shaped [..., 1].
    """
    assert origins.shape == directions.shape and origins.shape[-1] == 3
    batch_shape = origins.shape[:-1]
    n = math.prod(batch_shape) if batch_shape else 1

    if use_pallas is None:
        use_pallas = n >= _MIN_PALLAS_RAYS_AOS
    if not use_pallas:
        return _sphere_collider_jnp(origins, directions, rr=float(radius) ** 2,
                                    near_plane=float(near_plane),
                                    far_plane=float(far_plane))

    o_soa = origins.reshape(n, 3).T      # the one unavoidable layout pass for AoS
    d_soa = directions.reshape(n, 3).T
    nears, fars, mask = sphere_collider_soa(o_soa, d_soa, radius=radius,
                                            near_plane=near_plane,
                                            far_plane=far_plane,
                                            tile_rows=tile_rows, use_pallas=True)
    return (nears.reshape(batch_shape + (1,)),
            fars.reshape(batch_shape + (1,)),
            mask.reshape(batch_shape + (1,)))


# TODO(synk): RayBundle container plumbing (early return when nears/fars are
# already set, metadata dict update) stays in Python; only the numeric
# set_nears_and_fars math is implemented as a kernel.


if __name__ == "__main__":
    key = jax.random.PRNGKey(0)
    k_o, k_d, k_o2, k_d2 = jax.random.split(key, 4)

    # Case 1: SoA fast path (zero wrapper input copies), N multiple of 128.
    N1 = 6144
    o_soa = jax.random.uniform(k_o, (3, N1), jnp.float32, minval=-2.0, maxval=2.0)
    d_soa = jax.random.normal(k_d, (3, N1), jnp.float32)
    d_soa = d_soa / jnp.linalg.norm(d_soa, axis=0, keepdims=True)

    nears, fars, mask = sphere_collider_soa(o_soa, d_soa, radius=1.0,
                                            near_plane=0.1, far_plane=1000.0,
                                            use_pallas=True)
    jax.block_until_ready((nears, fars, mask))

    r_nears, r_fars, r_mask = _sphere_collider_jnp(o_soa.T, d_soa.T, rr=1.0,
                                                   near_plane=0.1, far_plane=1000.0)
    assert nears.shape == (N1, 1) and fars.shape == (N1, 1) and mask.shape == (N1, 1)
    assert mask.dtype == jnp.bool_
    assert jnp.allclose(nears, r_nears, atol=5e-4, rtol=1e-4)
    assert jnp.allclose(fars, r_fars, atol=5e-4, rtol=1e-4)
    assert jnp.array_equal(mask, r_mask)

    # Case 2: AoS [..., 3] wrapper with a ragged (non-multiple-of-128) ray count
    # to exercise the padded / edge-block handling.
    N2 = 5000
    o_aos = jax.random.uniform(k_o2, (N2, 3), jnp.float32, minval=-2.0, maxval=2.0)
    d_aos = jax.random.normal(k_d2, (N2, 3), jnp.float32)
    d_aos = d_aos / jnp.linalg.norm(d_aos, axis=-1, keepdims=True)

    nears2, fars2, mask2 = sphere_collider(o_aos, d_aos, radius=1.0, near_plane=0.1,
                                           far_plane=1000.0, use_pallas=True)
    jax.block_until_ready((nears2, fars2, mask2))

    r_nears2, r_fars2, r_mask2 = _sphere_collider_jnp(o_aos, d_aos, rr=1.0,
                                                      near_plane=0.1, far_plane=1000.0)
    assert nears2.shape == (N2, 1) and fars2.shape == (N2, 1) and mask2.shape == (N2, 1)
    assert mask2.dtype == jnp.bool_
    assert jnp.allclose(nears2, r_nears2, atol=5e-4, rtol=1e-4)
    assert jnp.allclose(fars2, r_fars2, atol=5e-4, rtol=1e-4)
    assert jnp.array_equal(mask2, r_mask2)

    print("KERNEL_OK")
</pallas_src>

<mosaic_0001>
module attributes {stable_mosaic.version = 11 : i64} {
  func.func @_sphere_collider_kernel(%arg0: i32, %arg1: memref<3x16x128xf32, #tpu.memory_space<vmem>>, %arg2: memref<3x16x128xf32, #tpu.memory_space<vmem>>, %arg3: memref<16x128xf32, #tpu.memory_space<vmem>>, %arg4: memref<16x128xf32, #tpu.memory_space<vmem>>, %arg5: memref<16x128xi8, #tpu.memory_space<vmem>>) attributes {dimension_semantics = [#tpu.dimension_semantics<parallel>], iteration_bounds = array<i64: 3>, scalar_prefetch = 0 : i64, scratch_operands = 0 : i64, tpu.core_type = #tpu.core_type<tc>, window_params = [{transform_indices = @transform_0, window_bounds = array<i64: 3, 16, 128>}, {transform_indices = @transform_1, window_bounds = array<i64: 3, 16, 128>}, {transform_indices = @transform_2, window_bounds = array<i64: 16, 128>}, {transform_indices = @transform_3, window_bounds = array<i64: 16, 128>}, {transform_indices = @transform_4, window_bounds = array<i64: 16, 128>}]} {
    %c0 = arith.constant 0 : index
    %c0_0 = arith.constant 0 : index
    %c0_1 = arith.constant 0 : index
    %0 = vector.load %arg1[%c0, %c0_0, %c0_1] : memref<3x16x128xf32, #tpu.memory_space<vmem>>, vector<1x16x128xf32>
    %1 = vector.shape_cast %0 : vector<1x16x128xf32> to vector<16x128xf32>
    %c1 = arith.constant 1 : index
    %c0_2 = arith.constant 0 : index
    %c0_3 = arith.constant 0 : index
    %2 = vector.load %arg1[%c1, %c0_2, %c0_3] : memref<3x16x128xf32, #tpu.memory_space<vmem>>, vector<1x16x128xf32>
    %3 = vector.shape_cast %2 : vector<1x16x128xf32> to vector<16x128xf32>
    %c2 = arith.constant 2 : index
    %c0_4 = arith.constant 0 : index
    %c0_5 = arith.constant 0 : index
    %4 = vector.load %arg1[%c2, %c0_4, %c0_5] : memref<3x16x128xf32, #tpu.memory_space<vmem>>, vector<1x16x128xf32>
    %5 = vector.shape_cast %4 : vector<1x16x128xf32> to vector<16x128xf32>
    %c0_6 = arith.constant 0 : index
    %c0_7 = arith.constant 0 : index
    %c0_8 = arith.constant 0 : index
    %6 = vector.load %arg2[%c0_6, %c0_7, %c0_8] : memref<3x16x128xf32, #tpu.memory_space<vmem>>, vector<1x16x128xf32>
    %7 = vector.shape_cast %6 : vector<1x16x128xf32> to vector<16x128xf32>
    %c1_9 = arith.constant 1 : index
    %c0_10 = arith.constant 0 : index
    %c0_11 = arith.constant 0 : index
    %8 = vector.load %arg2[%c1_9, %c0_10, %c0_11] : memref<3x16x128xf32, #tpu.memory_space<vmem>>, vector<1x16x128xf32>
    %9 = vector.shape_cast %8 : vector<1x16x128xf32> to vector<16x128xf32>
    %c2_12 = arith.constant 2 : index
    %c0_13 = arith.constant 0 : index
    %c0_14 = arith.constant 0 : index
    %10 = vector.load %arg2[%c2_12, %c0_13, %c0_14] : memref<3x16x128xf32, #tpu.memory_space<vmem>>, vector<1x16x128xf32>
    %11 = vector.shape_cast %10 : vector<1x16x128xf32> to vector<16x128xf32>
    %12 = arith.mulf %1, %7 : vector<16x128xf32>
    %13 = arith.mulf %3, %9 : vector<16x128xf32>
    %14 = arith.addf %12, %13 : vector<16x128xf32>
    %15 = arith.mulf %5, %11 : vector<16x128xf32>
    %16 = arith.addf %14, %15 : vector<16x128xf32>
    %17 = arith.mulf %1, %1 : vector<16x128xf32>
    %18 = arith.mulf %3, %3 : vector<16x128xf32>
    %19 = arith.addf %17, %18 : vector<16x128xf32>
    %20 = arith.mulf %5, %5 : vector<16x128xf32>
    %21 = arith.addf %19, %20 : vector<16x128xf32>
    %22 = arith.mulf %16, %16 : vector<16x128xf32>
    %23 = arith.subf %21, %22 : vector<16x128xf32>
    %cst = arith.constant 0.000000e+00 : f32
    %24 = vector.broadcast %cst : f32 to vector<16x128xf32>
    %25 = arith.cmpf oge, %16, %24 : vector<16x128xf32>
    %cst_15 = arith.constant 1.000000e+00 : f32
    %26 = vector.broadcast %cst_15 : f32 to vector<16x128xf32>
    %27 = arith.cmpf oge, %23, %26 : vector<16x128xf32>
    %28 = arith.ori %25, %27 : vector<16x128xi1>
    %cst_16 = arith.constant 1.000000e+00 : f32
    %29 = vector.broadcast %cst_16 : f32 to vector<16x128xf32>
    %30 = arith.subf %29, %23 : vector<16x128xf32>
    %cst_17 = arith.constant 0.000000e+00 : f32
    %31 = vector.broadcast %cst_17 : f32 to vector<16x128xf32>
    %32 = arith.maximumf %30, %31 : vector<16x128xf32>
    %33 = math.sqrt %32 : vector<16x128xf32>
    %cst_18 = arith.constant 0.000000e+00 : f32
    %34 = vector.broadcast %cst_18 : f32 to vector<16x128xf32>
    %35 = arith.subf %34, %33 : vector<16x128xf32>
    %36 = arith.subf %35, %16 : vector<16x128xf32>
    %cst_19 = arith.constant 1.000000e-01 : f32
    %37 = vector.broadcast %cst_19 : f32 to vector<16x128xf32>
    %38 = arith.select %28, %37, %36 : vector<16x128xi1>, vector<16x128xf32>
    %c0_20 = arith.constant 0 : index
    %c0_21 = arith.constant 0 : index
    %39 = vector.load %arg3[%c0_20, %c0_21] : memref<16x128xf32, #tpu.memory_space<vmem>>, vector<16x128xf32>
    tpu.vector_store %arg3[%c0_20, %c0_21], %38 {strides = array<i32>} : memref<16x128xf32, #tpu.memory_space<vmem>>, vector<16x128xf32>,
    %40 = arith.subf %33, %16 : vector<16x128xf32>
    %cst_22 = arith.constant 1.000000e+03 : f32
    %41 = vector.broadcast %cst_22 : f32 to vector<16x128xf32>
    %42 = arith.select %28, %41, %40 : vector<16x128xi1>, vector<16x128xf32>
    %c0_23 = arith.constant 0 : index
    %c0_24 = arith.constant 0 : index
    %43 = vector.load %arg4[%c0_23, %c0_24] : memref<16x128xf32, #tpu.memory_space<vmem>>, vector<16x128xf32>
    tpu.vector_store %arg4[%c0_23, %c0_24], %42 {strides = array<i32>} : memref<16x128xf32, #tpu.memory_space<vmem>>, vector<16x128xf32>,
    %44 = arith.extui %28 : vector<16x128xi1> to vector<16x128xi8>
    %c0_25 = arith.constant 0 : index
    %c0_26 = arith.constant 0 : index
    %45 = vector.load %arg5[%c0_25, %c0_26] : memref<16x128xi8, #tpu.memory_space<vmem>>, vector<16x128xi8>
    tpu.vector_store %arg5[%c0_25, %c0_26], %44 {strides = array<i32>} : memref<16x128xi8, #tpu.memory_space<vmem>>, vector<16x128xi8>,
    return
  }
  func.func @transform_0(%arg0: i32) -> (i32, i32, i32) {
    %c0_i32 = arith.constant 0 : i32
    %c0_i32_0 = arith.constant 0 : i32
    %c0_i32_1 = arith.constant 0 : i32
    return %c0_i32, %arg0, %c0_i32_0 : i32, i32, i32
  }
  func.func @transform_1(%arg0: i32) -> (i32, i32, i32) {
    %c0_i32 = arith.constant 0 : i32
    %c0_i32_0 = arith.constant 0 : i32
    %c0_i32_1 = arith.constant 0 : i32
    return %c0_i32, %arg0, %c0_i32_0 : i32, i32, i32
  }
  func.func @transform_2(%arg0: i32) -> (i32, i32) {
    %c0_i32 = arith.constant 0 : i32
    %c0_i32_0 = arith.constant 0 : i32
    return %arg0, %c0_i32 : i32, i32
  }
  func.func @transform_3(%arg0: i32) -> (i32, i32) {
    %c0_i32 = arith.constant 0 : i32
    %c0_i32_0 = arith.constant 0 : i32
    return %arg0, %c0_i32 : i32, i32
  }
  func.func @transform_4(%arg0: i32) -> (i32, i32) {
    %c0_i32 = arith.constant 0 : i32
    %c0_i32_0 = arith.constant 0 : i32
    return %arg0, %c0_i32 : i32, i32
  }
}

</mosaic_0001>

<llo_original>
// kernel: tpu_custom_call.1
$region0: #{tpu_custom_call.1}
  #allocation0 [shape = 'u32[]', space=smem, size = 0x4, offset = 0x4, fixed_abs, tag = 'smem constant byte address 0x4 - core index']
  #allocation1 [shape = 'u32[144,128]{1,0:T(1,128)}', space=vmem, size = 0x12000, scoped, tag = 'internal scratch']
  #allocation11 [shape = 's32[]', space=sflag, size = 0x4, offset = 0, fixed_abs, tag = 'sflag constant byte address 0x0 - dummy sync flag']
  #allocation13 [shape = 's32[]', space=sflag, size = 0x4, offset = 0, fixed_abs, tag = 'sflag constant byte address 0x0 - dummy sync flag']
  %s0 = inlined_call_operand.hbm [shape: f32[3,48,128], index: 0, kind: input, shape index: {}]
  %s1 = inlined_call_operand.hbm [shape: f32[3,48,128], index: 1, kind: input, shape index: {}]
  %s2 = inlined_call_operand.hbm [shape: f32[48,128], index: 2, kind: output, shape index: {0}]
  %s3 = inlined_call_operand.hbm [shape: f32[48,128], index: 3, kind: output, shape index: {1}]
  %s4 = inlined_call_operand.hbm [shape: s8[48,128], index: 4, kind: output, shape index: {2}]
  %5 = xla_tuple %s2, %s3, %s4
  %s6 = sld [smem:[#allocation0]]
  $region65: #{tpu_custom_call.1} parent=0
    _
  %s8 = ssub.s32 1, %s6
  %s9 = scalar_select 0, %s8, %s6
  $region1: #{tpu_custom_call.1} parent=0
    #allocation2 [shape = 'u8[49152]{0}', space=vmem, size = 0xc000, scoped, tag = 'input window, operand 0']
    #allocation3 [shape = 's32[2]{0}', space=sflag, size = 0x8, scoped, tag = 'scoped memory for tpu_custom_call.1']
    #allocation4 [shape = 's32[2]{0}', space=sflag, size = 0x8, scoped, tag = 'scoped memory for tpu_custom_call.1']
    #allocation5 [shape = 'u8[49152]{0}', space=vmem, size = 0xc000, scoped, tag = 'input window, operand 1']
    #allocation6 [shape = 's32[2]{0}', space=sflag, size = 0x8, scoped, tag = 'scoped memory for tpu_custom_call.1']
    #allocation7 [shape = 'u8[16384]{0}', space=vmem, size = 0x4000, scoped, tag = 'output window, operand 0']
    #allocation8 [shape = 'u8[16384]{0}', space=vmem, size = 0x4000, scoped, tag = 'output window, operand 1']
    #allocation9 [shape = 's32[2]{0}', space=sflag, size = 0x8, scoped, tag = 'scoped memory for tpu_custom_call.1']
    #allocation10 [shape = 'u8[4096]{0}', space=vmem, size = 0x1000, scoped, tag = 'output window, operand 2']
    %10 = vsyncpa [#allocation3], 0
    %s11 = scalar_lea.sflag [#allocation3], 1
    %12 = vsyncpa %s11, 0
    %13 = vsyncpa [#allocation6], 0
    %s14 = scalar_lea.sflag [#allocation6], 1
    %15 = vsyncpa %s14, 0
    %16 = vsyncpa [#allocation4], 0
    %s17 = scalar_lea.sflag [#allocation4], 1
    %18 = vsyncpa %s17, 0
    %19 = vsyncpa [#allocation9], 0
    %s20 = scalar_lea.sflag [#allocation9], 1
    %21 = vsyncpa %s20, 0
    loop: start=0, step=1, limit=5
    $region2: #{tpu_custom_call.1} parent=1 // loop_pre_header
      _
    $region3: #{tpu_custom_call.1} parent=1 // loop_header
      %s23 = sphi 0, %s27
      %p24 = scmp.ge.s32.totalorder %s23, 5
      %s33 = sphi 0, %s35
      %s36 = sphi 0, %s33
      %s37 = sphi 0, %s36
      %s53 = sphi 0, %s37
      %s59 = sphi 0, %s61
      %s62 = sphi 0, %s59
      %s63 = sphi 0, %s62
      %s79 = sphi 0, %s63
      %s85 = sphi 0, %s87
      %s88 = sphi 0, %s85
      %s89 = sphi 0, %s88
      %s105 = sphi 0, %s89
      %s111 = sphi 0, %s113
      %s114 = sphi 0, %s111
      %s115 = sphi 0, %s114
      %s131 = sphi 0, %s115
      %s137 = sphi 0, %s139
      %s140 = sphi 0, %s137
      %s141 = sphi 0, %s140
      %s157 = sphi 0, %s141
    $region4: #{tpu_custom_call.1} parent=1 // loop_header_branch
      %26 = sbr.rel (%p24) target = $region8
    $region5: #{tpu_custom_call.1} parent=1 // loop_body
      %s28 = ssub.s32 %s23, 1
      %s29 = ssub.s32 %s23, 2
      %s30 = sadd.s32 %s23, 1
      %s31 = ssub.s32 %s23, %s30
      %p32 = scmp.eq.s32.totalorder %s31, 0
      %s34 = sadd.s32 %s33, 1
      %s35 = scalar_select %p32, %s33, %s34
      %p38 = pneg %p32
      %p39 = scmp.eq.s32.totalorder %s23, 2
      %p40 = por %p38, %p39
      %p41 = scmp.ne.s32.totalorder %s33, %s36
      %p42 = scmp.eq.s32.totalorder %s23, 0
      %p43 = por %p41, %p42
      %p44 = scmp.ne.s32.totalorder %s33, %s36
      %p45 = scmp.eq.s32.totalorder %s28, 2
      %p46 = por %p44, %p45
      %p47 = scmp.ne.s32.totalorder %s36, %s37
      %p48 = scmp.eq.s32.totalorder %s28, 0
      %p49 = por %p47, %p48
      %p50 = scmp.ne.s32.totalorder %s36, %s37
      %p51 = scmp.eq.s32.totalorder %s29, 2
      %p52 = por %p50, %p51
      %p54 = scmp.ne.s32.totalorder %s37, %s53
      %p55 = scmp.eq.s32.totalorder %s29, 0
      %p56 = por %p54, %p55
      %s57 = ssub.s32 %s23, %s30
      %p58 = scmp.eq.s32.totalorder %s57, 0
      %s60 = sadd.s32 %s59, 1
      %s61 = scalar_select %p58, %s59, %s60
      %p64 = pneg %p58
      %p65 = scmp.eq.s32.totalorder %s23, 2
      %p66 = por %p64, %p65
      %p67 = scmp.ne.s32.totalorder %s59, %s62
      %p68 = scmp.eq.s32.totalorder %s23, 0
      %p69 = por %p67, %p68
      %p70 = scmp.ne.s32.totalorder %s59, %s62
      %p71 = scmp.eq.s32.totalorder %s28, 2
      %p72 = por %p70, %p71
      %p73 = scmp.ne.s32.totalorder %s62, %s63
      %p74 = scmp.eq.s32.totalorder %s28, 0
      %p75 = por %p73, %p74
      %p76 = scmp.ne.s32.totalorder %s62, %s63
      %p77 = scmp.eq.s32.totalorder %s29, 2
      %p78 = por %p76, %p77
      %p80 = scmp.ne.s32.totalorder %s63, %s79
      %p81 = scmp.eq.s32.totalorder %s29, 0
      %p82 = por %p80, %p81
      %s83 = ssub.s32 %s23, %s30
      %p84 = scmp.eq.s32.totalorder %s83, 0
      %s86 = sadd.s32 %s85, 1
      %s87 = scalar_select %p84, %s85, %s86
      %p90 = pneg %p84
      %p91 = scmp.eq.s32.totalorder %s23, 2
      %p92 = por %p90, %p91
      %p93 = scmp.ne.s32.totalorder %s85, %s88
      %p94 = scmp.eq.s32.totalorder %s23, 0
      %p95 = por %p93, %p94
      %p96 = scmp.ne.s32.totalorder %s85, %s88
      %p97 = scmp.eq.s32.totalorder %s28, 2
      %p98 = por %p96, %p97
      %p99 = scmp.ne.s32.totalorder %s88, %s89
      %p100 = scmp.eq.s32.totalorder %s28, 0
      %p101 = por %p99, %p100
      %p102 = scmp.ne.s32.totalorder %s88, %s89
      %p103 = scmp.eq.s32.totalorder %s29, 2
      %p104 = por %p102, %p103
      %p106 = scmp.ne.s32.totalorder %s89, %s105
      %p107 = scmp.eq.s32.totalorder %s29, 0
      %p108 = por %p106, %p107
      %s109 = ssub.s32 %s23, %s30
      %p110 = scmp.eq.s32.totalorder %s109, 0
      %s112 = sadd.s32 %s111, 1
      %s113 = scalar_select %p110, %s111, %s112
      %p116 = pneg %p110
      %p117 = scmp.eq.s32.totalorder %s23, 2
      %p118 = por %p116, %p117
      %p119 = scmp.ne.s32.totalorder %s111, %s114
      %p120 = scmp.eq.s32.totalorder %s23, 0
      %p121 = por %p119, %p120
      %p122 = scmp.ne.s32.totalorder %s111, %s114
      %p123 = scmp.eq.s32.totalorder %s28, 2
      %p124 = por %p122, %p123
      %p125 = scmp.ne.s32.totalorder %s114, %s115
      %p126 = scmp.eq.s32.totalorder %s28, 0
      %p127 = por %p125, %p126
      %p128 = scmp.ne.s32.totalorder %s114, %s115
      %p129 = scmp.eq.s32.totalorder %s29, 2
      %p130 = por %p128, %p129
      %p132 = scmp.ne.s32.totalorder %s115, %s131
      %p133 = scmp.eq.s32.totalorder %s29, 0
      %p134 = por %p132, %p133
      %s135 = ssub.s32 %s23, %s30
      %p136 = scmp.eq.s32.totalorder %s135, 0
      %s138 = sadd.s32 %s137, 1
      %s139 = scalar_select %p136, %s137, %s138
      %p142 = pneg %p136
      %p143 = scmp.eq.s32.totalorder %s23, 2
      %p144 = por %p142, %p143
      %p145 = scmp.ne.s32.totalorder %s137, %s140
      %p146 = scmp.eq.s32.totalorder %s23, 0
      %p147 = por %p145, %p146
      %p148 = scmp.ne.s32.totalorder %s137, %s140
      %p149 = scmp.eq.s32.totalorder %s28, 2
      %p150 = por %p148, %p149
      %p151 = scmp.ne.s32.totalorder %s140, %s141
      %p152 = scmp.eq.s32.totalorder %s28, 0
      %p153 = por %p151, %p152
      %p154 = scmp.ne.s32.totalorder %s140, %s141
      %p155 = scmp.eq.s32.totalorder %s29, 2
      %p156 = por %p154, %p155
      %p158 = scmp.ne.s32.totalorder %s141, %s157
      %p159 = scmp.eq.s32.totalorder %s29, 0
      %p160 = por %p158, %p159
      %p161 = scmp.le.s32.totalorder 1, %s23
      %p162 = scmp.lt.s32.totalorder %s23, 4
      %p163 = pnand %p161, %p162
      %p164 = pneg %p163
      // Predicated region
      $region9: #{tpu_custom_call.1} parent=5 // pred_check
        _
      $region10: #{tpu_custom_call.1} parent=5 // pred_check_branch
        %166 = sbr.rel (%p163) target = $region12
      $region11: #{tpu_custom_call.1} parent=5 // pred_region
        %s167 = ssub.s32 %s23, 1
      $region12: #{tpu_custom_call.1} parent=5 // pred_fallthru
        _
      %p168 = scmp.lt.s32.totalorder %s23, 3
      // Predicated region
      $region13: #{tpu_custom_call.1} parent=5 // pred_check
        %p169 = pneg %p168
      $region14: #{tpu_custom_call.1} parent=5 // pred_check_branch
        %171 = sbr.rel (%p169) target = $region16
      $region15: #{tpu_custom_call.1} parent=5 // pred_region
        // Predicated region
        $region17: #{tpu_custom_call.1} parent=15 // pred_check
          %p172 = pneg %p43
        $region18: #{tpu_custom_call.1} parent=15 // pred_check_branch
          %174 = sbr.rel (%p172) target = $region20
        $region19: #{tpu_custom_call.1} parent=15 // pred_region
          #allocation12 [shape = 'u32[6]{0}', space=smem, size = 0x18, scoped, tag = 'DMA stride descriptor']
          %s175 = sand.u32 %s33, 1
          %s176 = scalar_lea.sflag [#allocation3], %s175
          %s177 = sand.u32 %s33, 1
          %s178 = smul.addr %s177, 48
          %s179 = scalar_lea.vmem [#allocation2], %s178
          %s180 = smul.u32 2, %s23
          %s182 = ssub.s32 768, 768
          %183 = vsyncadd %s176, %s182
          %s184 = smul.addr %s180, 128
          %s185 = scalar_lea.hbm %s0, %s184
          %s187 = sshll.u32 1, 14
          %s188 = sxor.u32 4294967295, %s187
          %s190 = sld [smem:[#allocation0]]
          %s191 = sadd.s32 2, %s190
          %s193 = sshll.u32 7, 26
          %s194 = sxor.u32 4294967295, %s193
          %s195 = sand.u32 0, %s194
          %s196 = sshll.u32 %s191, 26
          %s197 = sor.u32 %s195, %s196
          %s198 = sshll.u32 %s179, 4
          %s199 = int_to_ptr.vmem [resolvable:$true] %s198
          %205 = sst [smem:[#allocation12]] 768
          %s206 = scalar_lea.smem [#allocation12], 1
          %207 = sst [smem:[%s206]] 256
          %s208 = scalar_lea.smem [#allocation12], 2
          %209 = sst [smem:[%s208]] 2
          %s210 = scalar_lea.smem [#allocation12], 3
          %211 = sst [smem:[%s210]] 128
          %s212 = scalar_lea.smem [#allocation12], 4
          %213 = sst [smem:[%s212]] 128
          %s214 = scalar_lea.smem [#allocation12], 5
          %215 = sst [smem:[%s214]] 8
          %217 = dma.general %s185, 768, %s199, %s176, [#allocation11], [#allocation12], %s197, 0
        $region20: #{tpu_custom_call.1} parent=15 // pred_fallthru
          _
        // Predicated region
        $region21: #{tpu_custom_call.1} parent=15 // pred_check
          %p218 = pneg %p69
        $region22: #{tpu_custom_call.1} parent=15 // pred_check_branch
          %220 = sbr.rel (%p218) target = $region24
        $region23: #{tpu_custom_call.1} parent=15 // pred_region
          #allocation14 [shape = 'u32[6]{0}', space=smem, size = 0x18, scoped, tag = 'DMA stride descriptor']
          %s221 = sand.u32 %s59, 1
          %s222 = scalar_lea.sflag [#allocation6], %s221
          %s223 = sand.u32 %s59, 1
          %s224 = smul.addr %s223, 48
          %s225 = scalar_lea.vmem [#allocation5], %s224
          %s226 = smul.u32 2, %s23
          %s228 = ssub.s32 768, 768
          %229 = vsyncadd %s222, %s228
          %s230 = smul.addr %s226, 128
          %s231 = scalar_lea.hbm %s1, %s230
          %s233 = sshll.u32 1, 14
          %s234 = sxor.u32 4294967295, %s233
          %s236 = sld [smem:[#allocation0]]
          %s237 = sadd.s32 2, %s236
          %s239 = sshll.u32 7, 26
          %s240 = sxor.u32 4294967295, %s239
          %s241 = sand.u32 0, %s240
          %s242 = sshll.u32 %s237, 26
          %s243 = sor.u32 %s241, %s242
          %s244 = sshll.u32 %s225, 4
          %s245 = int_to_ptr.vmem [resolvable:$true] %s244
          %251 = sst [smem:[#allocation14]] 768
          %s252 = scalar_lea.smem [#allocation14], 1
          %253 = sst [smem:[%s252]] 256
          %s254 = scalar_lea.smem [#allocation14], 2
          %255 = sst [smem:[%s254]] 2
          %s256 = scalar_lea.smem [#allocation14], 3
          %257 = sst [smem:[%s256]] 128
          %s258 = scalar_lea.smem [#allocation14], 4
          %259 = sst [smem:[%s258]] 128
          %s260 = scalar_lea.smem [#allocation14], 5
          %261 = sst [smem:[%s260]] 8
          %263 = dma.general %s231, 768, %s245, %s222, [#allocation13], [#allocation14], %s243, 0
        $region24: #{tpu_custom_call.1} parent=15 // pred_fallthru
          _
      $region16: #{tpu_custom_call.1} parent=5 // pred_fallthru
        _
      %p264 = scmp.le.s32.totalorder 1, %s23
      %p265 = scmp.lt.s32.totalorder %s23, 4
      %p266 = pnand %p264, %p265
      %p267 = pneg %p266
      // Predicated region
      $region25: #{tpu_custom_call.1} parent=5 // pred_check
        _
      $region26: #{tpu_custom_call.1} parent=5 // pred_check_branch
        %269 = sbr.rel (%p266) target = $region28
      $region27: #{tpu_custom_call.1} parent=5 // pred_region
        %s270 = ssub.s32 %s23, 1
        %s271 = sand.u32 %s36, 1
        %s272 = scalar_lea.sflag [#allocation3], %s271
        %s273 = sand.u32 %s36, 1
        %s274 = smul.addr %s273, 48
        %s275 = scalar_lea.vmem [#allocation2], %s274
        // Predicated region
        $region29: #{tpu_custom_call.1} parent=27 // pred_check
          %p276 = pneg %p49
        $region30: #{tpu_custom_call.1} parent=27 // pred_check_branch
          %278 = sbr.rel (%p276) target = $region32
        $region31: #{tpu_custom_call.1} parent=27 // pred_region
          %279 = dma.done %s272, 768
        $region32: #{tpu_custom_call.1} parent=27 // pred_fallthru
          _
        %s280 = sand.u32 %s62, 1
        %s281 = scalar_lea.sflag [#allocation6], %s280
        %s282 = sand.u32 %s62, 1
        %s283 = smul.addr %s282, 48
        %s284 = scalar_lea.vmem [#allocation5], %s283
        // Predicated region
        $region33: #{tpu_custom_call.1} parent=27 // pred_check
          %p285 = pneg %p75
        $region34: #{tpu_custom_call.1} parent=27 // pred_check_branch
          %287 = sbr.rel (%p285) target = $region36
        $region35: #{tpu_custom_call.1} parent=27 // pred_region
          %288 = dma.done %s281, 768
        $region36: #{tpu_custom_call.1} parent=27 // pred_fallthru
          _
        %s289 = sand.u32 %s36, 1
        %s290 = scalar_lea.sflag [#allocation3], %s289
        %s291 = sand.u32 %s36, 1
        %s292 = smul.addr %s291, 48
        %s293 = scalar_lea.vmem [#allocation2], %s292
        %p294 = pneg %p49
        %p295 = pneg %p46
        %s296 = sand.u32 %s62, 1
        %s297 = scalar_lea.sflag [#allocation6], %s296
        %s298 = sand.u32 %s62, 1
        %s299 = smul.addr %s298, 48
        %s300 = scalar_lea.vmem [#allocation5], %s299
        %p301 = pneg %p75
        %p302 = pneg %p72
        %p303 = pneg %p101
        %p304 = pneg %p98
        %s305 = sand.u32 %s88, 1
        %s306 = scalar_lea.sflag [#allocation4], %s305
        %s307 = sand.u32 %s88, 1
        %s308 = smul.addr %s307, 16
        %s309 = scalar_lea.vmem [#allocation7], %s308
        %p310 = pneg %p127
        %p311 = pneg %p124
        %s312 = sand.u32 %s28, 1
        %s313 = scalar_lea.sflag [#allocation9], %s312
        %s314 = sand.u32 %s114, 1
        %s315 = smul.addr %s314, 16
        %s316 = scalar_lea.vmem [#allocation8], %s315
        %p317 = pneg %p153
        %p318 = pneg %p150
        %s319 = sand.u32 %s28, 1
        %s320 = scalar_lea.sflag [#allocation9], %s319
        %s321 = sand.u32 %s140, 1
        %s322 = smul.addr %s321, 4
        %s323 = scalar_lea.vmem [#allocation10], %s322
        %s324 = smul.u32 2, %s28
        %s325 = smul.u32 2, %s28
        %s326 = smul.u32 2, %s28
        %s327 = smul.u32 2, %s28
        %s328 = smul.u32 2, %s28
        %v331 = vld [vmem:[%s275] sm:$0xff]
        %v332 = vld [vmem:[%s275 + $0x8] sm:$0xff]
        %s333 = scalar_lea.vmem %s275, 16 [#allocation2]
        %v334 = vld [vmem:[%s333] sm:$0xff]
        %v335 = vld [vmem:[%s333 + $0x8] sm:$0xff]
        %s336 = scalar_lea.vmem %s275, 32 [#allocation2]
        %v337 = vld [vmem:[%s336] sm:$0xff]
        %v338 = vld [vmem:[%s336 + $0x8] sm:$0xff]
        %v339 = vld [vmem:[%s284] sm:$0xff]
        %v340 = vld [vmem:[%s284 + $0x8] sm:$0xff]
        %s341 = scalar_lea.vmem %s284, 16 [#allocation5]
        %v342 = vld [vmem:[%s341] sm:$0xff]
        %v343 = vld [vmem:[%s341 + $0x8] sm:$0xff]
        %s344 = scalar_lea.vmem %s284, 32 [#allocation5]
        %v345 = vld [vmem:[%s344] sm:$0xff]
        %v346 = vld [vmem:[%s344 + $0x8] sm:$0xff]
        %v347 = vmul.f32 %v331, %v339
        %v348 = vmul.f32 %v332, %v340
        %v349 = vmul.f32 %v334, %v342
        %v350 = vmul.f32 %v335, %v343
        %v351 = vadd.f32 %v347, %v349
        %v352 = vadd.f32 %v348, %v350
        %v353 = vmul.f32 %v337, %v345
        %v354 = vmul.f32 %v338, %v346
        %v355 = vadd.f32 %v351, %v353
        %v356 = vadd.f32 %v352, %v354
        %v357 = vmul.f32 %v331, %v331
        %v358 = vmul.f32 %v332, %v332
        %v359 = vmul.f32 %v334, %v334
        %v360 = vmul.f32 %v335, %v335
        %v361 = vadd.f32 %v357, %v359
        %v362 = vadd.f32 %v358, %v360
        %v363 = vmul.f32 %v337, %v337
        %v364 = vmul.f32 %v338, %v338
        %v365 = vadd.f32 %v361, %v363
        %v366 = vadd.f32 %v362, %v364
        %v367 = vmul.f32 %v355, %v355
        %v368 = vmul.f32 %v356, %v356
        %v369 = vsub.f32 %v365, %v367
        %v370 = vsub.f32 %v366, %v368
        %vm371 = vcmp.ge.f32.partialorder %v355, 0.0
        %vm372 = vcmp.ge.f32.partialorder %v356, 0.0
        %vm373 = vcmp.ge.f32.partialorder %v369, 1.0
        %vm374 = vcmp.ge.f32.partialorder %v370, 1.0
        %vm375 = vmor %vm371, %vm373
        %vm376 = vmor %vm372, %vm374
        %v377 = vsub.f32 1.0, %v369
        %v378 = vsub.f32 1.0, %v370
        %v379 = vmax.f32 %v377, 0.0
        %v380 = vmax.f32 %v378, 0.0
        %v381 = vrsqrt.pop %v379
        %v382 = vmul.f32 %v379, %v381
        %vm383 = vcmp.eq.f32.partialorder %v379, inf
        %v384 = vsel %vm383, %v379, %v382
        %vm385 = vcmp.eq.f32.partialorder %v379, 0.0
        %v386 = vand.u32 %v379, 2147483648
        %v387 = vsel %vm385, %v386, %v384
        %v388 = vrsqrt.pop %v380
        %v389 = vmul.f32 %v380, %v388
        %vm390 = vcmp.eq.f32.partialorder %v380, inf
        %v391 = vsel %vm390, %v380, %v389
        %vm392 = vcmp.eq.f32.partialorder %v380, 0.0
        %v393 = vand.u32 %v380, 2147483648
        %v394 = vsel %vm392, %v393, %v391
        %v395 = vsub.f32 0.0, %v387
        %v396 = vsub.f32 0.0, %v394
        %v397 = vsub.f32 %v395, %v355
        %v398 = vsub.f32 %v396, %v356
        %v399 = vsel %vm375, 0.1, %v397
        %v400 = vsel %vm376, 0.1, %v398
        %401 = vst [vmem:[%s309] sm:$0xff] %v399
        %402 = vst [vmem:[%s309 + $0x8] sm:$0xff] %v400
        %v403 = vsub.f32 %v387, %v355
        %v404 = vsub.f32 %v394, %v356
        %v405 = vsel %vm375, 1000.0, %v403
        %v406 = vsel %vm376, 1000.0, %v404
        %407 = vst [vmem:[%s316] sm:$0xff] %v405
        %408 = vst [vmem:[%s316 + $0x8] sm:$0xff] %v406
        %vm409 = vmpackc.low %vm376, %vm375
        %vm410 = vmpackc.even %vm409, %vm409
        %v411 = vsel %vm410, 16843009, 0
        %v412 = vunpack.c.0.s8 %v411
        %v413 = vunpack.c.1.s8 %v411
        %v414 = vpack.c.b16 %v412, %v412
        %v415 = vpack.c.b8 %v414, %v414
        %v416 = vpack.c.b16 %v413, %v413
        %v417 = vpack.c.b8 %v416, %v416
        %418 = vst [vmem:[%s323] sm:$0x3] %v415
        %419 = vst [vmem:[%s323 + $0x2] sm:$0x3] %v417
        %s420 = sand.u32 %s88, 1
        %s421 = scalar_lea.sflag [#allocation4], %s420
        %s422 = sand.u32 %s88, 1
        %s423 = smul.addr %s422, 16
        %s424 = scalar_lea.vmem [#allocation7], %s423
        %s425 = sand.u32 %s28, 1
        %s426 = scalar_lea.sflag [#allocation9], %s425
        %s427 = sand.u32 %s114, 1
        %s428 = smul.addr %s427, 16
        %s429 = scalar_lea.vmem [#allocation8], %s428
        %s430 = sand.u32 %s28, 1
        %s431 = scalar_lea.sflag [#allocation9], %s430
        %s432 = sand.u32 %s140, 1
        %s433 = smul.addr %s432, 4
        %s434 = scalar_lea.vmem [#allocation10], %s433
        // Predicated region
        $region37: #{tpu_custom_call.1} parent=27 // pred_check
          %p435 = pneg %p98
        $region38: #{tpu_custom_call.1} parent=27 // pred_check_branch
          %437 = sbr.rel (%p435) target = $region40
        $region39: #{tpu_custom_call.1} parent=27 // pred_region
          %s438 = smul.u32 2, %s28
          %s440 = ssub.s32 256, 256
          %441 = vsyncadd %s421, %s440
          %s442 = smul.addr %s438, 128
          %s443 = scalar_lea.hbm %s2, %s442
          %s444 = sshll.u32 %s424, 4
          %s445 = int_to_ptr.vmem [resolvable:$true] %s444
          %450 = dma.vmem_to_hbm [thread:$0]  %s445, 256, %s443, %s421, 128, 128, 8
        $region40: #{tpu_custom_call.1} parent=27 // pred_fallthru
          _
        // Predicated region
        $region41: #{tpu_custom_call.1} parent=27 // pred_check
          %p451 = pneg %p124
        $region42: #{tpu_custom_call.1} parent=27 // pred_check_branch
          %453 = sbr.rel (%p451) target = $region44
        $region43: #{tpu_custom_call.1} parent=27 // pred_region
          %s454 = smul.u32 2, %s28
          %s456 = ssub.s32 256, 256
          %457 = vsyncadd %s426, %s456
          %s458 = smul.addr %s454, 128
          %s459 = scalar_lea.hbm %s3, %s458
          %s460 = sshll.u32 %s429, 4
          %s461 = int_to_ptr.vmem [resolvable:$true] %s460
          %466 = dma.vmem_to_hbm [thread:$0]  %s461, 256, %s459, %s426, 128, 128, 8
        $region44: #{tpu_custom_call.1} parent=27 // pred_fallthru
          _
        // Predicated region
        $region45: #{tpu_custom_call.1} parent=27 // pred_check
          %p467 = pneg %p150
        $region46: #{tpu_custom_call.1} parent=27 // pred_check_branch
          %469 = sbr.rel (%p467) target = $region48
        $region47: #{tpu_custom_call.1} parent=27 // pred_region
          %s470 = smul.u32 2, %s28
          %s472 = ssub.s32 64, 64
          %473 = vsyncadd %s431, %s472
          %s474 = smul.addr %s470, 32
          %s475 = scalar_lea.hbm %s4, %s474
          %s476 = sshll.u32 %s434, 4
          %s477 = int_to_ptr.vmem [resolvable:$true] %s476
          %482 = dma.vmem_to_hbm [thread:$0]  %s477, 64, %s475, %s431, 32, 32, 2
        $region48: #{tpu_custom_call.1} parent=27 // pred_fallthru
          _
      $region28: #{tpu_custom_call.1} parent=5 // pred_fallthru
        _
      %p483 = scmp.le.s32.totalorder 2, %s23
      // Predicated region
      $region49: #{tpu_custom_call.1} parent=5 // pred_check
        %p484 = pneg %p483
      $region50: #{tpu_custom_call.1} parent=5 // pred_check_branch
        %486 = sbr.rel (%p484) target = $region52
      $region51: #{tpu_custom_call.1} parent=5 // pred_region
        %s487 = ssub.s32 %s23, 2
        // Predicated region
        $region53: #{tpu_custom_call.1} parent=51 // pred_check
          %p488 = pneg %p104
        $region54: #{tpu_custom_call.1} parent=51 // pred_check_branch
          %490 = sbr.rel (%p488) target = $region56
        $region55: #{tpu_custom_call.1} parent=51 // pred_region
          %s491 = sand.u32 %s89, 1
          %s492 = scalar_lea.sflag [#allocation4], %s491
          %s493 = sand.u32 %s89, 1
          %s494 = smul.addr %s493, 16
          %s495 = scalar_lea.vmem [#allocation7], %s494
          %496 = dma.done %s492, 256
        $region56: #{tpu_custom_call.1} parent=51 // pred_fallthru
          _
        // Predicated region
        $region57: #{tpu_custom_call.1} parent=51 // pred_check
          %p497 = pneg %p130
        $region58: #{tpu_custom_call.1} parent=51 // pred_check_branch
          %499 = sbr.rel (%p497) target = $region60
        $region59: #{tpu_custom_call.1} parent=51 // pred_region
          %s500 = sand.u32 %s29, 1
          %s501 = scalar_lea.sflag [#allocation9], %s500
          %s502 = sand.u32 %s115, 1
          %s503 = smul.addr %s502, 16
          %s504 = scalar_lea.vmem [#allocation8], %s503
          %505 = dma.done %s501, 256
        $region60: #{tpu_custom_call.1} parent=51 // pred_fallthru
          _
        // Predicated region
        $region61: #{tpu_custom_call.1} parent=51 // pred_check
          %p506 = pneg %p156
        $region62: #{tpu_custom_call.1} parent=51 // pred_check_branch
          %508 = sbr.rel (%p506) target = $region64
        $region63: #{tpu_custom_call.1} parent=51 // pred_region
          %s509 = sand.u32 %s29, 1
          %s510 = scalar_lea.sflag [#allocation9], %s509
          %s511 = sand.u32 %s141, 1
          %s512 = smul.addr %s511, 4
          %s513 = scalar_lea.vmem [#allocation10], %s512
          %514 = dma.done %s510, 64
        $region64: #{tpu_custom_call.1} parent=51 // pred_fallthru
          _
      $region52: #{tpu_custom_call.1} parent=5 // pred_fallthru
        _
    $region6: #{tpu_custom_call.1} parent=1 // loop_footer
      %s27 = sadd.s32 1, %s23
    $region7: #{tpu_custom_call.1} parent=1 // loop_footer_branch
      %22 = sbr.rel target = $region3
    $region8: #{tpu_custom_call.1} parent=1 // loop_exit
      _
    %515 = vsyncpa [#allocation3], 1
    %s516 = scalar_lea.sflag [#allocation3], 1
    %517 = vsyncpa %s516, 1
    %518 = vsyncpa [#allocation6], 1
    %s519 = scalar_lea.sflag [#allocation6], 1
    %520 = vsyncpa %s519, 1
    %521 = vsyncpa [#allocation4], 1
    %s522 = scalar_lea.sflag [#allocation4], 1
    %523 = vsyncpa %s522, 1
    %524 = vsyncpa [#allocation9], 1
    %s525 = scalar_lea.sflag [#allocation9], 1
    %526 = vsyncpa %s525, 1

</llo_original>
